<compile_context>
chip_gen: v7x
topology: tpu7x:2x2x1
jax: 0.10.0
libtpu: 0.0.40
codegen_flags: <defaults>
</compile_context>

<pallas_src>
import jax
import jax.numpy as jnp
from jax.experimental import pallas as pl
from jax.experimental.pallas import tpu as pltpu

MIDI_NORM = 128.0
_LW = 128            # lane width of the reshaped slab (multiple of 128)
_MAX_TR = 4096       # row-block cap: 4096*128*4 B = 2 MiB per f32 block
_MIN_BLOCKS = 4      # on big inputs keep >=4 blocks so v7x's 2 TCs both work


def _cdiv(a, b):
    return -(-a // b)


def _round_up(x, m):
    return _cdiv(x, m) * m


def _inharm_kernel(params_ref, pitch_ref, out_ref):
    """params_ref: SMEM (4,) f32 = [scale0, scale1, bias0, bias1]
       pitch_ref : VMEM (TR, 128) f32
       out = exp(pitch*scale0 + bias0) + exp(pitch*scale1 + bias1)
    """
    p = pitch_ref[...]
    b0 = p * params_ref[0] + params_ref[2]
    b1 = p * params_ref[1] + params_ref[3]
    out_ref[...] = (jnp.exp(b0) + jnp.exp(b1)).astype(out_ref.dtype)


def _inharm_kernel_gi(params_ref, pitch_ref, rowbias_ref, out_ref):
    """Global-inharm path: bias1 + msw*10*gi is pre-folded into a per-row
       bias column rowbias_ref (TR, 1), lane-broadcast onto bridge 1."""
    p = pitch_ref[...]
    b0 = p * params_ref[0] + params_ref[2]
    b1 = p * params_ref[1] + rowbias_ref[...]
    out_ref[...] = (jnp.exp(b0) + jnp.exp(b1)).astype(out_ref.dtype)


def make_params():
    """Deterministic parameter init, exactly as in the module's __init__."""
    treble_slope = 0.0926
    treble_intercept = -13.64
    bass_slope = -0.0847
    bass_intercept = -5.82

    slopes = jnp.array([treble_slope * MIDI_NORM, bass_slope * MIDI_NORM],
                       dtype=jnp.float32)
    offsets = jnp.array(
        [treble_intercept / (MIDI_NORM * treble_slope),
         bass_intercept / (MIDI_NORM * bass_slope)],
        dtype=jnp.float32)
    slopes_modifier = jnp.zeros(2, dtype=jnp.float32)
    offsets_modifier = jnp.zeros(2, dtype=jnp.float32)
    model_specific_weight = jnp.float32(0.0)
    return dict(slopes=slopes, offsets=offsets,
                slopes_modifier=slopes_modifier,
                offsets_modifier=offsets_modifier,
                model_specific_weight=model_specific_weight)


def inharmonicity_forward(params, extended_pitch, global_inharm=None,
                          out_dtype=jnp.float32, max_block_rows=_MAX_TR):
    """extended_pitch: (B, n_frames, 1) f32
       global_inharm : (B, 1, 1) f32 or None
       returns       : (B, n_frames, 1) out_dtype (default f32)
    """
    B, F, _ = extended_pitch.shape

    # ---- sublane/lane-dense layout: (rows, 128) slab ------------------------
    F_pad = _round_up(max(F, 1), _LW)
    rows_per_batch = F_pad // _LW
    rows = B * rows_per_batch

    pitch = extended_pitch.reshape(B, F).astype(jnp.float32)
    if F_pad != F:
        # <= 127 zero frames per batch; fuses into the relayout the
        # (B, F, 1) -> (rows, 128) reshape needs anyway.
        pitch = jnp.pad(pitch, ((0, 0), (0, F_pad - F)))
    slab = pitch.reshape(rows, _LW)

    # ---- block / grid selection (ragged last block handled by Pallas) -------
    if rows <= max_block_rows:
        tr = rows                                   # single block == full dims
    else:
        tr = min(max_block_rows, _cdiv(rows, _MIN_BLOCKS))
        tr = max(8, _round_up(tr, 8))               # keep (8,128) tiling legal
    n_blocks = _cdiv(rows, tr)

    # ---- fold normalization & offsets: bridge_i = pitch*scale_i + bias_i ----
    slopes = (params["slopes"] + params["slopes_modifier"]).astype(jnp.float32)
    offsets = (params["offsets"] + params["offsets_modifier"]).astype(jnp.float32)
    scales = slopes * (1.0 / MIDI_NORM)                               # (2,)
    biases = slopes * offsets                                         # (2,)
    scalar_params = jnp.concatenate([scales, biases]).astype(jnp.float32)  # (4,)

    out_itemsize = jnp.dtype(out_dtype).itemsize
    gi_bytes = 0 if global_inharm is None else 4 * rows
    cost = pl.CostEstimate(flops=6 * rows * _LW,
                           transcendentals=2 * rows * _LW,
                           bytes_accessed=(4 + out_itemsize) * rows * _LW + gi_bytes)
    cparams = pltpu.CompilerParams(dimension_semantics=("parallel",))

    if global_inharm is None:
        grid_spec = pltpu.PrefetchScalarGridSpec(
            num_scalar_prefetch=1,
            grid=(n_blocks,),
            in_specs=[pl.BlockSpec((tr, _LW), lambda i, sp: (i, 0))],
            out_specs=pl.BlockSpec((tr, _LW), lambda i, sp: (i, 0)),
        )
        out_slab = pl.pallas_call(
            _inharm_kernel,
            out_shape=jax.ShapeDtypeStruct((rows, _LW), out_dtype),
            grid_spec=grid_spec,
            compiler_params=cparams,
            cost_estimate=cost,
        )(scalar_params, slab)
    else:
        # Per-row bias column: bias1 + msw*10*gi_batch(row).  Rows never span
        # batches because F_pad % 128 == 0.
        gi = global_inharm.reshape(B).astype(jnp.float32)             # (B,)
        row_bias = biases[1] + 10.0 * params["model_specific_weight"] * gi
        row_bias = jnp.repeat(row_bias, rows_per_batch)[:, None]      # (rows, 1)

        grid_spec = pltpu.PrefetchScalarGridSpec(
            num_scalar_prefetch=1,
            grid=(n_blocks,),
            in_specs=[pl.BlockSpec((tr, _LW), lambda i, sp: (i, 0)),
                      pl.BlockSpec((tr, 1), lambda i, sp: (i, 0))],
            out_specs=pl.BlockSpec((tr, _LW), lambda i, sp: (i, 0)),
        )
        out_slab = pl.pallas_call(
            _inharm_kernel_gi,
            out_shape=jax.ShapeDtypeStruct((rows, _LW), out_dtype),
            grid_spec=grid_spec,
            compiler_params=cparams,
            cost_estimate=cost,
        )(scalar_params, slab, row_bias)

    out = out_slab.reshape(B, F_pad)
    if F_pad != F:
        out = out[:, :F]
    return out[..., None]                                             # (B, F, 1)


def _reference_forward(params, extended_pitch, global_inharm=None):
    """Pure-JAX reference matching the PyTorch module, for verification."""
    reduced = extended_pitch / MIDI_NORM                              # (B, F, 1)
    slopes = params["slopes"] + params["slopes_modifier"]             # (2,)
    offsets = params["offsets"] + params["offsets_modifier"]          # (2,)
    bridges = slopes * (reduced + offsets)                            # (B, F, 2)
    if global_inharm is not None:
        gi = global_inharm * 10.0
        gi = jnp.concatenate([jnp.zeros_like(gi), gi], axis=-1)       # (B, 1, 2)
        bridges = bridges + params["model_specific_weight"] * gi
    return jnp.sum(jnp.exp(bridges), axis=-1, keepdims=True)


if __name__ == "__main__":
    key = jax.random.PRNGKey(0)
    k1, k2, k3, k4 = jax.random.split(key, 4)

    params = make_params()
    # Nonzero model-specific weight so the global_inharm path is exercised
    # numerically (init value in the module is 0.0).
    params["model_specific_weight"] = jnp.float32(0.37)

    # Small primary case (B=2, F=8), with and without global_inharm.
    B, F = 2, 8
    extended_pitch = jax.random.uniform(k1, (B, F, 1), jnp.float32,
                                        minval=21.0, maxval=108.0)
    global_inharm = jax.random.normal(k2, (B, 1, 1), jnp.float32) * 0.1

    out = jax.block_until_ready(
        inharmonicity_forward(params, extended_pitch, global_inharm))
    ref = _reference_forward(params, extended_pitch, global_inharm)
    assert out.shape == (B, F, 1)
    assert jnp.allclose(out, ref, rtol=2e-5, atol=1e-8), (out, ref)

    out_none = jax.block_until_ready(
        inharmonicity_forward(params, extended_pitch))
    ref_none = _reference_forward(params, extended_pitch)
    assert jnp.allclose(out_none, ref_none, rtol=2e-5, atol=1e-8)

    # Larger frame count: exercises frame padding (1500 -> 1536), the
    # per-row global-inharm bias, and (with max_block_rows=8) a multi-step
    # grid with a ragged final row-block.
    B2, F2 = 3, 1500
    pitch2 = jax.random.uniform(k3, (B2, F2, 1), jnp.float32,
                                minval=21.0, maxval=108.0)
    gi2 = jax.random.normal(k4, (B2, 1, 1), jnp.float32) * 0.05

    out2 = jax.block_until_ready(inharmonicity_forward(params, pitch2, gi2))
    ref2 = _reference_forward(params, pitch2, gi2)
    assert out2.shape == (B2, F2, 1)
    assert jnp.allclose(out2, ref2, rtol=2e-5, atol=1e-8)

    out3 = jax.block_until_ready(
        inharmonicity_forward(params, pitch2, gi2, max_block_rows=8))
    assert jnp.allclose(out3, ref2, rtol=2e-5, atol=1e-8)

    out4 = jax.block_until_ready(inharmonicity_forward(params, pitch2, None))
    ref4 = _reference_forward(params, pitch2, None)
    assert jnp.allclose(out4, ref4, rtol=2e-5, atol=1e-8)

    print("KERNEL_OK")
</pallas_src>

<mosaic_0001>
module attributes {stable_mosaic.version = 11 : i64} {
  func.func @_inharm_kernel_gi(%arg0: i32, %arg1: memref<4xf32, #tpu.memory_space<smem>>, %arg2: memref<2x128xf32, #tpu.memory_space<vmem>>, %arg3: memref<2x1xf32, #tpu.memory_space<vmem>>, %arg4: memref<2x128xf32, #tpu.memory_space<vmem>>) attributes {dimension_semantics = [#tpu.dimension_semantics<parallel>], iteration_bounds = array<i64: 1>, scalar_prefetch = 1 : i64, scratch_operands = 0 : i64, tpu.core_type = #tpu.core_type<tc>, window_params = [{transform_indices = @transform_0, window_bounds = array<i64: 2, 128>}, {transform_indices = @transform_1, window_bounds = array<i64: 2, 1>}, {transform_indices = @transform_2, window_bounds = array<i64: 2, 128>}]} {
    %c0 = arith.constant 0 : index
    %c0_0 = arith.constant 0 : index
    %0 = vector.load %arg2[%c0, %c0_0] : memref<2x128xf32, #tpu.memory_space<vmem>>, vector<2x128xf32>
    %c0_1 = arith.constant 0 : index
    %1 = memref.load %arg1[%c0_1] : memref<4xf32, #tpu.memory_space<smem>>
    %2 = vector.broadcast %1 : f32 to vector<2x128xf32>
    %3 = arith.mulf %0, %2 : vector<2x128xf32>
    %c2 = arith.constant 2 : index
    %4 = memref.load %arg1[%c2] : memref<4xf32, #tpu.memory_space<smem>>
    %5 = vector.broadcast %4 : f32 to vector<2x128xf32>
    %6 = arith.addf %3, %5 : vector<2x128xf32>
    %c1 = arith.constant 1 : index
    %7 = memref.load %arg1[%c1] : memref<4xf32, #tpu.memory_space<smem>>
    %8 = vector.broadcast %7 : f32 to vector<2x128xf32>
    %9 = arith.mulf %0, %8 : vector<2x128xf32>
    %c0_2 = arith.constant 0 : index
    %c0_3 = arith.constant 0 : index
    %10 = vector.load %arg3[%c0_2, %c0_3] : memref<2x1xf32, #tpu.memory_space<vmem>>, vector<2x1xf32>
    %11 = vector.broadcast %10 : vector<2x1xf32> to vector<2x128xf32>
    %12 = arith.addf %9, %11 : vector<2x128xf32>
    %13 = math.exp %6 : vector<2x128xf32>
    %14 = math.exp %12 : vector<2x128xf32>
    %15 = arith.addf %13, %14 : vector<2x128xf32>
    %c0_4 = arith.constant 0 : index
    %c0_5 = arith.constant 0 : index
    %16 = vector.load %arg4[%c0_4, %c0_5] : memref<2x128xf32, #tpu.memory_space<vmem>>, vector<2x128xf32>
    tpu.vector_store %arg4[%c0_4, %c0_5], %15 {strides = array<i32>} : memref<2x128xf32, #tpu.memory_space<vmem>>, vector<2x128xf32>,
    return
  }
  func.func @transform_0(%arg0: i32, %arg1: memref<4xf32, #tpu.memory_space<smem>>) -> (i32, i32) {
    %c0_i32 = arith.constant 0 : i32
    %c0_i32_0 = arith.constant 0 : i32
    return %arg0, %c0_i32 : i32, i32
  }
  func.func @transform_1(%arg0: i32, %arg1: memref<4xf32, #tpu.memory_space<smem>>) -> (i32, i32) {
    %c0_i32 = arith.constant 0 : i32
    %c0_i32_0 = arith.constant 0 : i32
    return %arg0, %c0_i32 : i32, i32
  }
  func.func @transform_2(%arg0: i32, %arg1: memref<4xf32, #tpu.memory_space<smem>>) -> (i32, i32) {
    %c0_i32 = arith.constant 0 : i32
    %c0_i32_0 = arith.constant 0 : i32
    return %arg0, %c0_i32 : i32, i32
  }
}

</mosaic_0001>

<llo_original>
// kernel: tpu_custom_call.1
$region0: #{tpu_custom_call.1}
  #allocation0 [shape = 'u32[]', space=smem, size = 0x4, offset = 0x4, fixed_abs, tag = 'smem constant byte address 0x4 - core index']
  #allocation1 [shape = 'u32[144,128]{1,0:T(1,128)}', space=vmem, size = 0x12000, scoped, tag = 'internal scratch']
  #allocation2 [shape = 's32[1]{0}', space=sflag, size = 0x4, scoped, tag = 'scoped memory for tpu_custom_call.1']
  #allocation3 [shape = 'u8[512]{0}', space=smem, size = 0x200, scoped, tag = 'prefetched SMEM operand 0']
  %s0 = inlined_call_operand.vmem [shape: f32[4], index: 0, kind: input, shape index: {}]
  %s1 = inlined_call_operand.vmem [shape: f32[2,128], index: 1, kind: input, shape index: {}]
  %s2 = inlined_call_operand.vmem [shape: f32[2,1], index: 2, kind: input, shape index: {}]
  %s3 = inlined_call_operand.hbm [shape: f32[2,128], index: 3, kind: output, shape index: {}]
  %s4 = sld [smem:[#allocation0]]
  $region18: #{tpu_custom_call.1} parent=0
    _
  %s6 = ssub.s32 1, %s4
  %s7 = scalar_select 0, %s6, %s4
  %s8 = sshll.u32 %s0, 4
  %s9 = int_to_ptr.vmem [resolvable:$true] %s8
  %11 = dma.vmem_to_smem %s9, 16, [#allocation3], [#allocation2]
  %12 = dma.done [#allocation2], 16
  %13 = sfence
  $region1: #{tpu_custom_call.1} parent=0
    #allocation4 [shape = 'u8[1024]{0}', space=vmem, size = 0x400, scoped, tag = 'output window, operand 0, single buffered']
    #allocation5 [shape = 's32[1]{0}', space=sflag, size = 0x4, scoped, tag = 'scoped memory for tpu_custom_call.1']
    %14 = vsyncpa [#allocation5], 0
    // Predicated region
    $region2: #{tpu_custom_call.1} parent=1 // pred_check
      _
    $region3: #{tpu_custom_call.1} parent=1 // pred_check_branch
      %16 = sbr.rel (0) target = $region5
    $region4: #{tpu_custom_call.1} parent=1 // pred_region
      _
    $region5: #{tpu_custom_call.1} parent=1 // pred_fallthru
      _
    // Predicated region
    $region6: #{tpu_custom_call.1} parent=1 // pred_check
      _
    $region7: #{tpu_custom_call.1} parent=1 // pred_check_branch
      %18 = sbr.rel (0) target = $region9
    $region8: #{tpu_custom_call.1} parent=1 // pred_region
      _
    $region9: #{tpu_custom_call.1} parent=1 // pred_fallthru
      _
    %v19 = vld [vmem:[%s1] sm:$0x3]
    %s20 = sld [smem:[#allocation3]]
    %v21 = vstv %s20
    %v22 = vmul.f32 %v19, %v21
    %s23 = sld [smem:[#allocation3 + $0x2]]
    %v24 = vstv %s23
    %v25 = vadd.f32 %v22, %v24
    %s26 = sld [smem:[#allocation3 + $0x1]]
    %v27 = vstv %s26
    %v28 = vmul.f32 %v19, %v27
    %v29 = vld [vmem:[%s2] sm:$0x3]
    %31 = vset.pattern.permute.xlu0 0
    %32 = vperm.xlu0 %31, %v29
    %v33 = vpop.permute.xlu0 %32
    %v35 = vadd.f32 %v28, %v33
    %v36 = vmul.f32 %v25, 1.442695
    %v37 = vpow.pop %v36
    %v38 = vmul.f32 %v35, 1.442695
    %v39 = vpow.pop %v38
    %v40 = vadd.f32 %v37, %v39
    %41 = vst [vmem:[#allocation4] sm:$0x3] %v40
    // Predicated region
    $region10: #{tpu_custom_call.1} parent=1 // pred_check
      _
    $region11: #{tpu_custom_call.1} parent=1 // pred_check_branch
      %43 = sbr.rel (0) target = $region13
    $region12: #{tpu_custom_call.1} parent=1 // pred_region
      %s45 = ssub.s32 32, 32
      %46 = vsyncadd [#allocation5], %s45
      %s48 = sshll.u32 [#allocation4], 4
      %s49 = int_to_ptr.vmem [resolvable:$true] %s48
      %51 = dma.vmem_to_hbm [thread:$0]  %s49, 32, %s3, [#allocation5]
    $region13: #{tpu_custom_call.1} parent=1 // pred_fallthru
      _
    // Predicated region
    $region14: #{tpu_custom_call.1} parent=1 // pred_check
      _
    $region15: #{tpu_custom_call.1} parent=1 // pred_check_branch
      %53 = sbr.rel (0) target = $region17
    $region16: #{tpu_custom_call.1} parent=1 // pred_region
      %54 = dma.done [#allocation5], 32
    $region17: #{tpu_custom_call.1} parent=1 // pred_fallthru
      _
    %55 = vsyncpa [#allocation5], 1

</llo_original>
